<compile_context>
chip_gen: v7x
topology: tpu7x:2x2x1
jax: 0.10.0
libtpu: 0.0.40
codegen_flags: <defaults>
</compile_context>

<pallas_src>
import jax
import jax.numpy as jnp
from jax.experimental import pallas as pl
from jax.experimental.pallas import tpu as pltpu

HIDDEN_SIZE = 100
HIDDEN_PAD = 128                                  # 100 -> 128 lane-aligned
INPUT_SIZE = 8 * 8 * 12 + 2 + 8 * 8 * 12 + 2      # = 1540
OUTPUT_SIZE = 1

# TM=512: double-buffered x (2 * 512 * 1540 * 4B ~= 6.3 MB) + bf16 weights
# (~0.45 MB) fits the default scoped-VMEM limit on all targets; 1024 gains <1%.
DEFAULT_BLOCK_M = 512


def _mlp_kernel(x_ref, w1_ref, b1_ref, w2_ref, b2_ref, w3_ref, b3_ref, o_ref):
    # fc1 + ReLU  (bf16 MXU matmul over K=1540, f32 accumulate)
    x = x_ref[...].astype(jnp.bfloat16)
    h1 = jnp.dot(x, w1_ref[...], preferred_element_type=jnp.float32) + b1_ref[...]
    h1 = jnp.maximum(h1, 0.0)

    # fc2 + ReLU  (128x128 MXU tile)
    h2 = jnp.dot(h1.astype(jnp.bfloat16), w2_ref[...],
                 preferred_element_type=jnp.float32) + b2_ref[...]
    h2 = jnp.maximum(h2, 0.0)

    # fc3: output width 1 -> VPU multiply + lane reduction (skip a wasteful
    # N=1 MXU issue; VPU/XLU slots are free in this mem-bound kernel).
    out = jnp.sum(h2 * w3_ref[...], axis=-1, keepdims=True) + b3_ref[...]
    o_ref[...] = out.astype(o_ref.dtype)


def linear_piece_selection_forward(x, params, *, block_m=DEFAULT_BLOCK_M):
    """x: [batch, INPUT_SIZE] f32 -> [batch, OUTPUT_SIZE] f32."""
    w1, b1, w2, b2, w3, b3 = params
    batch = x.shape[0]
    # tm == batch (full dim, always legal) for small batches; otherwise a
    # multiple-of-8 block (512) streamed over a 1-D grid.
    tm = min(block_m, batch)
    grid = (pl.cdiv(batch, tm),)

    # Constant index_map => identical block every grid step => weights/biases
    # are fetched once and stay resident in VMEM while x/out stream per step.
    def const(a):
        return pl.BlockSpec(a.shape, lambda i: (0,) * a.ndim)

    return pl.pallas_call(
        _mlp_kernel,
        out_shape=jax.ShapeDtypeStruct((batch, OUTPUT_SIZE), jnp.float32),
        grid=grid,
        in_specs=[
            pl.BlockSpec((tm, INPUT_SIZE), lambda i: (i, 0)),   # x (streamed)
            const(w1), const(b1),                               # fc1
            const(w2), const(b2),                               # fc2
            const(w3), const(b3),                               # fc3
        ],
        out_specs=pl.BlockSpec((tm, OUTPUT_SIZE), lambda i: (i, 0)),
        compiler_params=pltpu.CompilerParams(
            dimension_semantics=("parallel",)),
    )(x, w1, b1, w2, b2, w3, b3)


def init_params(key):
    """PyTorch-default-style init (uniform(-1/sqrt(fan_in), 1/sqrt(fan_in))),
    then packed for the kernel:
      weights transposed to [in, out], hidden dim zero-padded 100 -> 128,
      weights cast to bf16; biases kept f32 (zero-padded);
      fc3 weight stored as a [1, 128] f32 row, fc3 bias as [1, 1]."""
    def linear(k, fan_in, fan_out):
        kw, kb = jax.random.split(k)
        bound = 1.0 / (fan_in ** 0.5)
        w = jax.random.uniform(kw, (fan_in, fan_out), jnp.float32, -bound, bound)
        b = jax.random.uniform(kb, (1, fan_out), jnp.float32, -bound, bound)
        return w, b

    k1, k2, k3 = jax.random.split(key, 3)
    w1, b1 = linear(k1, INPUT_SIZE, HIDDEN_SIZE)
    w2, b2 = linear(k2, HIDDEN_SIZE, HIDDEN_SIZE)
    w3, b3 = linear(k3, HIDDEN_SIZE, OUTPUT_SIZE)

    pad_cols = lambda a, n: jnp.pad(a, ((0, 0), (0, n - a.shape[1])))
    pad_rows = lambda a, n: jnp.pad(a, ((0, n - a.shape[0]), (0, 0)))

    w1p = pad_cols(w1, HIDDEN_PAD).astype(jnp.bfloat16)                        # [1540,128]
    b1p = pad_cols(b1, HIDDEN_PAD)                                             # [1,128] f32
    w2p = pad_cols(pad_rows(w2, HIDDEN_PAD), HIDDEN_PAD).astype(jnp.bfloat16)  # [128,128]
    b2p = pad_cols(b2, HIDDEN_PAD)                                             # [1,128] f32
    w3p = pad_cols(w3.T, HIDDEN_PAD)                                           # [1,128] f32
    b3p = b3                                                                   # [1,1]  f32
    return (w1p, b1p, w2p, b2p, w3p, b3p)


def reference_forward(x, params):
    """Pure-JAX reference mirroring the kernel's numerics (same packed params,
    bf16 operands, f32 accumulation)."""
    w1, b1, w2, b2, w3, b3 = params
    h1 = jnp.maximum(
        jnp.dot(x.astype(jnp.bfloat16), w1, preferred_element_type=jnp.float32) + b1, 0.0)
    h2 = jnp.maximum(
        jnp.dot(h1.astype(jnp.bfloat16), w2, preferred_element_type=jnp.float32) + b2, 0.0)
    return jnp.sum(h2 * w3, axis=-1, keepdims=True) + b3


if __name__ == "__main__":
    key = jax.random.PRNGKey(0)
    kx, kp = jax.random.split(key)

    batch = 2
    x = jax.random.normal(kx, (batch, INPUT_SIZE), jnp.float32)
    params = init_params(kp)

    out = linear_piece_selection_forward(x, params)
    out = jax.block_until_ready(out)

    ref = reference_forward(x, params)
    assert out.shape == (batch, OUTPUT_SIZE), out.shape
    assert jnp.allclose(out, ref, atol=1e-3, rtol=1e-3), (out, ref)

    print("KERNEL_OK")
</pallas_src>

<mosaic_0001>
module attributes {stable_mosaic.version = 11 : i64} {
  func.func @_mlp_kernel(%arg0: i32, %arg1: memref<2x1540xf32, #tpu.memory_space<vmem>>, %arg2: memref<1540x128xbf16, #tpu.memory_space<vmem>>, %arg3: memref<1x128xf32, #tpu.memory_space<vmem>>, %arg4: memref<128x128xbf16, #tpu.memory_space<vmem>>, %arg5: memref<1x128xf32, #tpu.memory_space<vmem>>, %arg6: memref<1x128xf32, #tpu.memory_space<vmem>>, %arg7: memref<1x1xf32, #tpu.memory_space<vmem>>, %arg8: memref<2x1xf32, #tpu.memory_space<vmem>>) attributes {dimension_semantics = [#tpu.dimension_semantics<parallel>], iteration_bounds = array<i64: 1>, scalar_prefetch = 0 : i64, scratch_operands = 0 : i64, tpu.core_type = #tpu.core_type<tc>, window_params = [{transform_indices = @transform_0, window_bounds = array<i64: 2, 1540>}, {pipeline_mode = #tpu.pipeline_mode<synchronous>, transform_indices = @transform_1, window_bounds = array<i64: 1540, 128>}, {pipeline_mode = #tpu.pipeline_mode<synchronous>, transform_indices = @transform_2, window_bounds = array<i64: 1, 128>}, {pipeline_mode = #tpu.pipeline_mode<synchronous>, transform_indices = @transform_3, window_bounds = array<i64: 128, 128>}, {pipeline_mode = #tpu.pipeline_mode<synchronous>, transform_indices = @transform_4, window_bounds = array<i64: 1, 128>}, {pipeline_mode = #tpu.pipeline_mode<synchronous>, transform_indices = @transform_5, window_bounds = array<i64: 1, 128>}, {pipeline_mode = #tpu.pipeline_mode<synchronous>, transform_indices = @transform_6, window_bounds = array<i64: 1, 1>}, {transform_indices = @transform_7, window_bounds = array<i64: 2, 1>}]} {
    %c0 = arith.constant 0 : index
    %c0_0 = arith.constant 0 : index
    %0 = vector.load %arg1[%c0, %c0_0] : memref<2x1540xf32, #tpu.memory_space<vmem>>, vector<2x1540xf32>
    %1 = arith.truncf %0 : vector<2x1540xf32> to vector<2x1540xbf16>
    %c0_1 = arith.constant 0 : index
    %c0_2 = arith.constant 0 : index
    %2 = vector.load %arg2[%c0_1, %c0_2] : memref<1540x128xbf16, #tpu.memory_space<vmem>>, vector<1540x128xbf16>
    %cst = arith.constant dense<0.000000e+00> : vector<2x128xf32>
    %3 = tpu.matmul %1, %2, %cst {dimension_numbers = #tpu.dot_dimension_numbers<[1], [0], [0], [1], [0, 0, 1, 1], [], []>} : vector<2x1540xbf16>, vector<1540x128xbf16>, vector<2x128xf32> -> vector<2x128xf32>
    %c0_3 = arith.constant 0 : index
    %c0_4 = arith.constant 0 : index
    %4 = vector.load %arg3[%c0_3, %c0_4] : memref<1x128xf32, #tpu.memory_space<vmem>>, vector<1x128xf32>
    %5 = vector.broadcast %4 : vector<1x128xf32> to vector<2x128xf32>
    %6 = arith.addf %3, %5 : vector<2x128xf32>
    %cst_5 = arith.constant 0.000000e+00 : f32
    %7 = vector.broadcast %cst_5 : f32 to vector<2x128xf32>
    %8 = arith.maximumf %6, %7 : vector<2x128xf32>
    %9 = arith.truncf %8 : vector<2x128xf32> to vector<2x128xbf16>
    %c0_6 = arith.constant 0 : index
    %c0_7 = arith.constant 0 : index
    %10 = vector.load %arg4[%c0_6, %c0_7] : memref<128x128xbf16, #tpu.memory_space<vmem>>, vector<128x128xbf16>
    %cst_8 = arith.constant dense<0.000000e+00> : vector<2x128xf32>
    %11 = tpu.matmul %9, %10, %cst_8 {dimension_numbers = #tpu.dot_dimension_numbers<[1], [0], [0], [1], [0, 0, 1, 1], [], []>} : vector<2x128xbf16>, vector<128x128xbf16>, vector<2x128xf32> -> vector<2x128xf32>
    %c0_9 = arith.constant 0 : index
    %c0_10 = arith.constant 0 : index
    %12 = vector.load %arg5[%c0_9, %c0_10] : memref<1x128xf32, #tpu.memory_space<vmem>>, vector<1x128xf32>
    %13 = vector.broadcast %12 : vector<1x128xf32> to vector<2x128xf32>
    %14 = arith.addf %11, %13 : vector<2x128xf32>
    %cst_11 = arith.constant 0.000000e+00 : f32
    %15 = vector.broadcast %cst_11 : f32 to vector<2x128xf32>
    %16 = arith.maximumf %14, %15 : vector<2x128xf32>
    %c0_12 = arith.constant 0 : index
    %c0_13 = arith.constant 0 : index
    %17 = vector.load %arg6[%c0_12, %c0_13] : memref<1x128xf32, #tpu.memory_space<vmem>>, vector<1x128xf32>
    %18 = vector.broadcast %17 : vector<1x128xf32> to vector<2x128xf32>
    %19 = arith.mulf %16, %18 : vector<2x128xf32>
    %cst_14 = arith.constant dense<0.000000e+00> : vector<2xf32>
    %20 = vector.multi_reduction <add>, %19, %cst_14 [1] : vector<2x128xf32> to vector<2xf32>
    %21 = vector.shape_cast %20 : vector<2xf32> to vector<2x1xf32>
    %c0_15 = arith.constant 0 : index
    %c0_16 = arith.constant 0 : index
    %22 = vector.load %arg7[%c0_15, %c0_16] : memref<1x1xf32, #tpu.memory_space<vmem>>, vector<1x1xf32>
    %23 = vector.broadcast %22 : vector<1x1xf32> to vector<2x1xf32>
    %24 = arith.addf %21, %23 : vector<2x1xf32>
    %c0_17 = arith.constant 0 : index
    %c0_18 = arith.constant 0 : index
    %25 = vector.load %arg8[%c0_17, %c0_18] : memref<2x1xf32, #tpu.memory_space<vmem>>, vector<2x1xf32>
    tpu.vector_store %arg8[%c0_17, %c0_18], %24 {strides = array<i32>} : memref<2x1xf32, #tpu.memory_space<vmem>>, vector<2x1xf32>,
    return
  }
  func.func @transform_0(%arg0: i32) -> (i32, i32) {
    %c0_i32 = arith.constant 0 : i32
    %c0_i32_0 = arith.constant 0 : i32
    return %arg0, %c0_i32 : i32, i32
  }
  func.func @transform_1(%arg0: i32) -> (i32, i32) {
    %c0_i32 = arith.constant 0 : i32
    %c0_i32_0 = arith.constant 0 : i32
    %c0_i32_1 = arith.constant 0 : i32
    return %c0_i32, %c0_i32_0 : i32, i32
  }
  func.func @transform_2(%arg0: i32) -> (i32, i32) {
    %c0_i32 = arith.constant 0 : i32
    %c0_i32_0 = arith.constant 0 : i32
    %c0_i32_1 = arith.constant 0 : i32
    return %c0_i32, %c0_i32_0 : i32, i32
  }
  func.func @transform_3(%arg0: i32) -> (i32, i32) {
    %c0_i32 = arith.constant 0 : i32
    %c0_i32_0 = arith.constant 0 : i32
    %c0_i32_1 = arith.constant 0 : i32
    return %c0_i32, %c0_i32_0 : i32, i32
  }
  func.func @transform_4(%arg0: i32) -> (i32, i32) {
    %c0_i32 = arith.constant 0 : i32
    %c0_i32_0 = arith.constant 0 : i32
    %c0_i32_1 = arith.constant 0 : i32
    return %c0_i32, %c0_i32_0 : i32, i32
  }
  func.func @transform_5(%arg0: i32) -> (i32, i32) {
    %c0_i32 = arith.constant 0 : i32
    %c0_i32_0 = arith.constant 0 : i32
    %c0_i32_1 = arith.constant 0 : i32
    return %c0_i32, %c0_i32_0 : i32, i32
  }
  func.func @transform_6(%arg0: i32) -> (i32, i32) {
    %c0_i32 = arith.constant 0 : i32
    %c0_i32_0 = arith.constant 0 : i32
    %c0_i32_1 = arith.constant 0 : i32
    return %c0_i32, %c0_i32_0 : i32, i32
  }
  func.func @transform_7(%arg0: i32) -> (i32, i32) {
    %c0_i32 = arith.constant 0 : i32
    %c0_i32_0 = arith.constant 0 : i32
    return %arg0, %c0_i32 : i32, i32
  }
}

</mosaic_0001>

<llo_original>
// kernel: tpu_custom_call.1
$region0: #{tpu_custom_call.1}
  #allocation0 [shape = 'u32[]', space=smem, size = 0x4, offset = 0x4, fixed_abs, tag = 'smem constant byte address 0x4 - core index']
  #allocation1 [shape = 'u32[144,128]{1,0:T(1,128)}', space=vmem, size = 0x12000, scoped, tag = 'internal scratch']
  #allocation2 [shape = 'f32[1,1]{1,0:T(1,128)S(1)}', space=vmem, size = 0x200, scoped, tag = 'scoped memory for tpu_custom_call.1']
  %s0 = inlined_call_operand.hbm [shape: f32[2,1540], index: 0, kind: input, shape index: {}]
  %s1 = inlined_call_operand.hbm [shape: bf16[1540,128], index: 1, kind: input, shape index: {}]
  %s2 = inlined_call_operand.vmem [shape: f32[1,128], index: 2, kind: input, shape index: {}]
  %s3 = inlined_call_operand.hbm [shape: bf16[128,128], index: 3, kind: input, shape index: {}]
  %s4 = inlined_call_operand.vmem [shape: f32[1,128], index: 4, kind: input, shape index: {}]
  %s5 = inlined_call_operand.vmem [shape: f32[1,128], index: 5, kind: input, shape index: {}]
  %s6 = inlined_call_operand.<no memory space> [shape: f32[1,1], index: 6, kind: input, shape index: {}]
  %s7 = inlined_call_operand.vmem [shape: f32[2,1], index: 7, kind: output, shape index: {}]
  %s8 = sld [smem:[#allocation0]]
  $region50: #{tpu_custom_call.1} parent=0
    _
  %s10 = ssub.s32 1, %s8
  %s11 = scalar_select 0, %s10, %s8
  %v12 = vstv %s6
  %13 = vst [vmem:[#allocation2] sm:$0x1] %v12
  $region1: #{tpu_custom_call.1} parent=0
    #allocation3 [shape = 'u8[13312]{0}', space=vmem, size = 0x3400, scoped, tag = 'input window, operand 0, single buffered']
    #allocation4 [shape = 's32[1]{0}', space=sflag, size = 0x4, scoped, tag = 'scoped memory for tpu_custom_call.1']
    #allocation5 [shape = 'u8[395264]{0}', space=vmem, size = 0x60800, scoped, tag = 'input window, operand 1, single buffered']
    #allocation6 [shape = 's32[1]{0}', space=sflag, size = 0x4, scoped, tag = 'scoped memory for tpu_custom_call.1']
    #allocation7 [shape = 'u8[32768]{0}', space=vmem, size = 0x8000, scoped, tag = 'input window, operand 3, single buffered']
    %14 = vsyncpa [#allocation4], 0
    %15 = vsyncpa [#allocation6], 0
    // Predicated region
    $region2: #{tpu_custom_call.1} parent=1 // pred_check
      _
    $region3: #{tpu_custom_call.1} parent=1 // pred_check_branch
      %17 = sbr.rel (0) target = $region5
    $region4: #{tpu_custom_call.1} parent=1 // pred_region
      %s19 = ssub.s32 416, 416
      %20 = vsyncadd [#allocation4], %s19
      %s22 = sshll.u32 [#allocation3], 4
      %s23 = int_to_ptr.vmem [resolvable:$true] %s22
      %25 = dma.hbm_to_vmem [thread:$0]  %s0, 416, %s23, [#allocation4]
    $region5: #{tpu_custom_call.1} parent=1 // pred_fallthru
      _
    // Predicated region
    $region6: #{tpu_custom_call.1} parent=1 // pred_check
      _
    $region7: #{tpu_custom_call.1} parent=1 // pred_check_branch
      %27 = sbr.rel (0) target = $region9
    $region8: #{tpu_custom_call.1} parent=1 // pred_region
      %s29 = ssub.s32 12352, 12352
      %30 = vsyncadd [#allocation6], %s29
      %s31 = sshll.u32 [#allocation5], 4
      %s32 = int_to_ptr.vmem [resolvable:$true] %s31
      %37 = dma.hbm_to_vmem [thread:$0]  %s1, 12352, %s32, [#allocation6], 64, 64, 4
    $region9: #{tpu_custom_call.1} parent=1 // pred_fallthru
      _
    // Predicated region
    $region10: #{tpu_custom_call.1} parent=1 // pred_check
      _
    $region11: #{tpu_custom_call.1} parent=1 // pred_check_branch
      %39 = sbr.rel (0) target = $region13
    $region12: #{tpu_custom_call.1} parent=1 // pred_region
      _
    $region13: #{tpu_custom_call.1} parent=1 // pred_fallthru
      _
    // Predicated region
    $region14: #{tpu_custom_call.1} parent=1 // pred_check
      _
    $region15: #{tpu_custom_call.1} parent=1 // pred_check_branch
      %41 = sbr.rel (0) target = $region17
    $region16: #{tpu_custom_call.1} parent=1 // pred_region
      %s43 = ssub.s32 1024, 1024
      %44 = vsyncadd [#allocation6], %s43
      %s45 = sshll.u32 [#allocation7], 4
      %s46 = int_to_ptr.vmem [resolvable:$true] %s45
      %51 = dma.hbm_to_vmem [thread:$0]  %s3, 1024, %s46, [#allocation6], 64, 64, 4
    $region17: #{tpu_custom_call.1} parent=1 // pred_fallthru
      _
    // Predicated region
    $region18: #{tpu_custom_call.1} parent=1 // pred_check
      _
    $region19: #{tpu_custom_call.1} parent=1 // pred_check_branch
      %53 = sbr.rel (0) target = $region21
    $region20: #{tpu_custom_call.1} parent=1 // pred_region
      _
    $region21: #{tpu_custom_call.1} parent=1 // pred_fallthru
      _
    // Predicated region
    $region22: #{tpu_custom_call.1} parent=1 // pred_check
      _
    $region23: #{tpu_custom_call.1} parent=1 // pred_check_branch
      %55 = sbr.rel (0) target = $region25
    $region24: #{tpu_custom_call.1} parent=1 // pred_region
      _
    $region25: #{tpu_custom_call.1} parent=1 // pred_fallthru
      _
    // Predicated region
    $region26: #{tpu_custom_call.1} parent=1 // pred_check
      _
    $region27: #{tpu_custom_call.1} parent=1 // pred_check_branch
      %57 = sbr.rel (0) target = $region29
    $region28: #{tpu_custom_call.1} parent=1 // pred_region
      _
    $region29: #{tpu_custom_call.1} parent=1 // pred_fallthru
      _
    // Predicated region
    $region30: #{tpu_custom_call.1} parent=1 // pred_check
      _
    $region31: #{tpu_custom_call.1} parent=1 // pred_check_branch
      %59 = sbr.rel (0) target = $region33
    $region32: #{tpu_custom_call.1} parent=1 // pred_region
      %60 = dma.done [#allocation4], 416
    $region33: #{tpu_custom_call.1} parent=1 // pred_fallthru
      _
    // Predicated region
    $region34: #{tpu_custom_call.1} parent=1 // pred_check
      _
    $region35: #{tpu_custom_call.1} parent=1 // pred_check_branch
      %62 = sbr.rel (0) target = $region37
    $region36: #{tpu_custom_call.1} parent=1 // pred_region
      %63 = dma.done [#allocation6], 12352
    $region37: #{tpu_custom_call.1} parent=1 // pred_fallthru
      _
    // Predicated region
    $region38: #{tpu_custom_call.1} parent=1 // pred_check
      _
    $region39: #{tpu_custom_call.1} parent=1 // pred_check_branch
      %65 = sbr.rel (0) target = $region41
    $region40: #{tpu_custom_call.1} parent=1 // pred_region
      %66 = dma.done [#allocation6], 1024
    $region41: #{tpu_custom_call.1} parent=1 // pred_fallthru
      _
    %v68 = vld [vmem:[#allocation3] sm:$0xff]
    %v69 = vld [vmem:[#allocation3 + $0x8] sm:$0xff]
    %v70 = vld [vmem:[#allocation3 + $0x10] sm:$0xff]
    %v71 = vld [vmem:[#allocation3 + $0x18] sm:$0x3]
    %v76 = vcombine.high %v68, %v68
    %v78 = vunpack.c.l.s4 1983009808
    %v79 = vunpack.c.0.s8 %v78
    %v80 = vlaneseq
    %v81 = vshrl.u32 %v80, 7
    %v82 = vsub.s32 %v79, %v81
    %v83 = vrot.slane %v68, %v82
    %v85 = vunpack.c.l.s4 1983009808
    %v86 = vunpack.c.0.s8 %v85
    %v87 = vlaneseq
    %v88 = vshrl.u32 %v87, 7
    %v89 = vsub.s32 %v86, %v88
    %v90 = vrot.slane %v76, %v89
    %v91 = vcombine.high %v83, %v83
    %v92 = vcombine.high %v90, %v90
    %v93 = vcombine.high %v69, %v69
    %v95 = vunpack.c.l.s4 1983009808
    %v96 = vunpack.c.0.s8 %v95
    %v97 = vlaneseq
    %v98 = vshrl.u32 %v97, 7
    %v99 = vsub.s32 %v96, %v98
    %v100 = vrot.slane %v69, %v99
    %v102 = vunpack.c.l.s4 1983009808
    %v103 = vunpack.c.0.s8 %v102
    %v104 = vlaneseq
    %v105 = vshrl.u32 %v104, 7
    %v106 = vsub.s32 %v103, %v105
    %v107 = vrot.slane %v93, %v106
    %v108 = vcombine.high %v100, %v100
    %v109 = vcombine.high %v107, %v107
    %v110 = vcombine.high %v70, %v70
    %v112 = vunpack.c.l.s4 1983009808
    %v113 = vunpack.c.0.s8 %v112
    %v114 = vlaneseq
    %v115 = vshrl.u32 %v114, 7
    %v116 = vsub.s32 %v113, %v115
    %v117 = vrot.slane %v70, %v116
    %v119 = vunpack.c.l.s4 1983009808
    %v120 = vunpack.c.0.s8 %v119
    %v121 = vlaneseq
    %v122 = vshrl.u32 %v121, 7
    %v123 = vsub.s32 %v120, %v122
    %v124 = vrot.slane %v110, %v123
    %v125 = vcombine.high %v117, %v117
    %v126 = vcombine.high %v124, %v124
    %v128 = vunpack.c.l.s4 1983009808
    %v129 = vunpack.c.0.s8 %v128
    %v130 = vlaneseq
    %v131 = vshrl.u32 %v130, 7
    %v132 = vsub.s32 %v129, %v131
    %v133 = vrot.slane %v71, %v132
    %v147 = vpack.c.bf16 %v83, %v83
    %v148 = vpack.c.bf16 %v91, %v91
    %v149 = vpack.c.bf16 %v90, %v90
    %v150 = vpack.c.bf16 %v92, %v92
    %v151 = vpack.c.bf16 %v100, %v100
    %v152 = vpack.c.bf16 %v108, %v108
    %v153 = vpack.c.bf16 %v107, %v107
    %v154 = vpack.c.bf16 %v109, %v109
    %v155 = vpack.c.bf16 %v117, %v117
    %v156 = vpack.c.bf16 %v125, %v125
    %v157 = vpack.c.bf16 %v124, %v124
    %v158 = vpack.c.bf16 %v126, %v126
    %v159 = vpack.c.bf16 %v133, %v133
    %v160 = vld [vmem:[#allocation5] sm:$0xf]
    %v161 = vld [vmem:[#allocation5 + $0x4] sm:$0xf]
    %v162 = vld [vmem:[#allocation5 + $0x8] sm:$0xf]
    %v163 = vld [vmem:[#allocation5 + $0xc] sm:$0xf]
    %v164 = vld [vmem:[#allocation5 + $0x10] sm:$0xf]
    %v165 = vld [vmem:[#allocation5 + $0x14] sm:$0xf]
    %v166 = vld [vmem:[#allocation5 + $0x18] sm:$0xf]
    %v167 = vld [vmem:[#allocation5 + $0x1c] sm:$0xf]
    %v168 = vld [vmem:[#allocation5 + $0x20] sm:$0xf]
    %v169 = vld [vmem:[#allocation5 + $0x24] sm:$0xf]
    %v170 = vld [vmem:[#allocation5 + $0x28] sm:$0xf]
    %v171 = vld [vmem:[#allocation5 + $0x2c] sm:$0xf]
    %v172 = vld [vmem:[#allocation5 + $0x30] sm:$0xf]
    %v173 = vld [vmem:[#allocation5 + $0x34] sm:$0xf]
    %v174 = vld [vmem:[#allocation5 + $0x38] sm:$0xf]
    %v175 = vld [vmem:[#allocation5 + $0x3c] sm:$0xf]
    %v176 = vld [vmem:[#allocation5 + $0x40] sm:$0xf]
    %v177 = vld [vmem:[#allocation5 + $0x44] sm:$0xf]
    %v178 = vld [vmem:[#allocation5 + $0x48] sm:$0xf]
    %v179 = vld [vmem:[#allocation5 + $0x4c] sm:$0xf]
    %v180 = vld [vmem:[#allocation5 + $0x50] sm:$0xf]
    %v181 = vld [vmem:[#allocation5 + $0x54] sm:$0xf]
    %v182 = vld [vmem:[#allocation5 + $0x58] sm:$0xf]
    %v183 = vld [vmem:[#allocation5 + $0x5c] sm:$0xf]
    %v184 = vld [vmem:[#allocation5 + $0x60] sm:$0xf]
    %v185 = vld [vmem:[#allocation5 + $0x64] sm:$0xf]
    %v186 = vld [vmem:[#allocation5 + $0x68] sm:$0xf]
    %v187 = vld [vmem:[#allocation5 + $0x6c] sm:$0xf]
    %v188 = vld [vmem:[#allocation5 + $0x70] sm:$0xf]
    %v189 = vld [vmem:[#allocation5 + $0x74] sm:$0xf]
    %v190 = vld [vmem:[#allocation5 + $0x78] sm:$0xf]
    %v191 = vld [vmem:[#allocation5 + $0x7c] sm:$0xf]
    %v192 = vld [vmem:[#allocation5 + $0x80] sm:$0xf]
    %v193 = vld [vmem:[#allocation5 + $0x84] sm:$0xf]
    %v194 = vld [vmem:[#allocation5 + $0x88] sm:$0xf]
    %v195 = vld [vmem:[#allocation5 + $0x8c] sm:$0xf]
    %v196 = vld [vmem:[#allocation5 + $0x90] sm:$0xf]
    %v197 = vld [vmem:[#allocation5 + $0x94] sm:$0xf]
    %v198 = vld [vmem:[#allocation5 + $0x98] sm:$0xf]
    %v199 = vld [vmem:[#allocation5 + $0x9c] sm:$0xf]
    %v200 = vld [vmem:[#allocation5 + $0xa0] sm:$0xf]
    %v201 = vld [vmem:[#allocation5 + $0xa4] sm:$0xf]
    %v202 = vld [vmem:[#allocation5 + $0xa8] sm:$0xf]
    %v203 = vld [vmem:[#allocation5 + $0xac] sm:$0xf]
    %v204 = vld [vmem:[#allocation5 + $0xb0] sm:$0xf]
    %v205 = vld [vmem:[#allocation5 + $0xb4] sm:$0xf]
    %v206 = vld [vmem:[#allocation5 + $0xb8] sm:$0xf]
    %v207 = vld [vmem:[#allocation5 + $0xbc] sm:$0xf]
    %v208 = vld [vmem:[#allocation5 + $0xc0] sm:$0xf]
    %v209 = vld [vmem:[#allocation5 + $0xc4] sm:$0xf]
    %v210 = vld [vmem:[#allocation5 + $0xc8] sm:$0xf]
    %v211 = vld [vmem:[#allocation5 + $0xcc] sm:$0xf]
    %v212 = vld [vmem:[#allocation5 + $0xd0] sm:$0xf]
    %v213 = vld [vmem:[#allocation5 + $0xd4] sm:$0xf]
    %v214 = vld [vmem:[#allocation5 + $0xd8] sm:$0xf]
    %v215 = vld [vmem:[#allocation5 + $0xdc] sm:$0xf]
    %v216 = vld [vmem:[#allocation5 + $0xe0] sm:$0xf]
    %v217 = vld [vmem:[#allocation5 + $0xe4] sm:$0xf]
    %v218 = vld [vmem:[#allocation5 + $0xe8] sm:$0xf]
    %v219 = vld [vmem:[#allocation5 + $0xec] sm:$0xf]
    %v220 = vld [vmem:[#allocation5 + $0xf0] sm:$0xf]
    %v221 = vld [vmem:[#allocation5 + $0xf4] sm:$0xf]
    %v222 = vld [vmem:[#allocation5 + $0xf8] sm:$0xf]
    %v223 = vld [vmem:[#allocation5 + $0xfc] sm:$0xf]
    %v224 = vld [vmem:[#allocation5 + $0x100] sm:$0xf]
    %v225 = vld [vmem:[#allocation5 + $0x104] sm:$0xf]
    %v226 = vld [vmem:[#allocation5 + $0x108] sm:$0xf]
    %v227 = vld [vmem:[#allocation5 + $0x10c] sm:$0xf]
    %v228 = vld [vmem:[#allocation5 + $0x110] sm:$0xf]
    %v229 = vld [vmem:[#allocation5 + $0x114] sm:$0xf]
    %v230 = vld [vmem:[#allocation5 + $0x118] sm:$0xf]
    %v231 = vld [vmem:[#allocation5 + $0x11c] sm:$0xf]
    %v232 = vld [vmem:[#allocation5 + $0x120] sm:$0xf]
    %v233 = vld [vmem:[#allocation5 + $0x124] sm:$0xf]
    %v234 = vld [vmem:[#allocation5 + $0x128] sm:$0xf]
    %v235 = vld [vmem:[#allocation5 + $0x12c] sm:$0xf]
    %v236 = vld [vmem:[#allocation5 + $0x130] sm:$0xf]
    %v237 = vld [vmem:[#allocation5 + $0x134] sm:$0xf]
    %v238 = vld [vmem:[#allocation5 + $0x138] sm:$0xf]
    %v239 = vld [vmem:[#allocation5 + $0x13c] sm:$0xf]
    %v240 = vld [vmem:[#allocation5 + $0x140] sm:$0xf]
    %v241 = vld [vmem:[#allocation5 + $0x144] sm:$0xf]
    %v242 = vld [vmem:[#allocation5 + $0x148] sm:$0xf]
    %v243 = vld [vmem:[#allocation5 + $0x14c] sm:$0xf]
    %v244 = vld [vmem:[#allocation5 + $0x150] sm:$0xf]
    %v245 = vld [vmem:[#allocation5 + $0x154] sm:$0xf]
    %v246 = vld [vmem:[#allocation5 + $0x158] sm:$0xf]
    %v247 = vld [vmem:[#allocation5 + $0x15c] sm:$0xf]
    %v248 = vld [vmem:[#allocation5 + $0x160] sm:$0xf]
    %v249 = vld [vmem:[#allocation5 + $0x164] sm:$0xf]
    %v250 = vld [vmem:[#allocation5 + $0x168] sm:$0xf]
    %v251 = vld [vmem:[#allocation5 + $0x16c] sm:$0xf]
    %v252 = vld [vmem:[#allocation5 + $0x170] sm:$0xf]
    %v253 = vld [vmem:[#allocation5 + $0x174] sm:$0xf]
    %v254 = vld [vmem:[#allocation5 + $0x178] sm:$0xf]
    %v255 = vld [vmem:[#allocation5 + $0x17c] sm:$0xf]
    %v256 = vld [vmem:[#allocation5 + $0x180] sm:$0xf]
    %v257 = vld [vmem:[#allocation5 + $0x184] sm:$0xf]
    %v258 = vld [vmem:[#allocation5 + $0x188] sm:$0xf]
    %v259 = vld [vmem:[#allocation5 + $0x18c] sm:$0xf]
    %v260 = vld [vmem:[#allocation5 + $0x190] sm:$0xf]
    %v261 = vld [vmem:[#allocation5 + $0x194] sm:$0xf]
    %v262 = vld [vmem:[#allocation5 + $0x198] sm:$0xf]
    %v263 = vld [vmem:[#allocation5 + $0x19c] sm:$0xf]
    %v264 = vld [vmem:[#allocation5 + $0x1a0] sm:$0xf]
    %v265 = vld [vmem:[#allocation5 + $0x1a4] sm:$0xf]
    %v266 = vld [vmem:[#allocation5 + $0x1a8] sm:$0xf]
    %v267 = vld [vmem:[#allocation5 + $0x1ac] sm:$0xf]
    %v268 = vld [vmem:[#allocation5 + $0x1b0] sm:$0xf]
    %v269 = vld [vmem:[#allocation5 + $0x1b4] sm:$0xf]
    %v270 = vld [vmem:[#allocation5 + $0x1b8] sm:$0xf]
    %v271 = vld [vmem:[#allocation5 + $0x1bc] sm:$0xf]
    %v272 = vld [vmem:[#allocation5 + $0x1c0] sm:$0xf]
    %v273 = vld [vmem:[#allocation5 + $0x1c4] sm:$0xf]
    %v274 = vld [vmem:[#allocation5 + $0x1c8] sm:$0xf]
    %v275 = vld [vmem:[#allocation5 + $0x1cc] sm:$0xf]
    %v276 = vld [vmem:[#allocation5 + $0x1d0] sm:$0xf]
    %v277 = vld [vmem:[#allocation5 + $0x1d4] sm:$0xf]
    %v278 = vld [vmem:[#allocation5 + $0x1d8] sm:$0xf]
    %v279 = vld [vmem:[#allocation5 + $0x1dc] sm:$0xf]
    %v280 = vld [vmem:[#allocation5 + $0x1e0] sm:$0xf]
    %v281 = vld [vmem:[#allocation5 + $0x1e4] sm:$0xf]
    %v282 = vld [vmem:[#allocation5 + $0x1e8] sm:$0xf]
    %v283 = vld [vmem:[#allocation5 + $0x1ec] sm:$0xf]
    %v284 = vld [vmem:[#allocation5 + $0x1f0] sm:$0xf]
    %v285 = vld [vmem:[#allocation5 + $0x1f4] sm:$0xf]
    %v286 = vld [vmem:[#allocation5 + $0x1f8] sm:$0xf]
    %v287 = vld [vmem:[#allocation5 + $0x1fc] sm:$0xf]
    %v288 = vld [vmem:[#allocation5 + $0x200] sm:$0xf]
    %v289 = vld [vmem:[#allocation5 + $0x204] sm:$0xf]
    %v290 = vld [vmem:[#allocation5 + $0x208] sm:$0xf]
    %v291 = vld [vmem:[#allocation5 + $0x20c] sm:$0xf]
    %v292 = vld [vmem:[#allocation5 + $0x210] sm:$0xf]
    %v293 = vld [vmem:[#allocation5 + $0x214] sm:$0xf]
    %v294 = vld [vmem:[#allocation5 + $0x218] sm:$0xf]
    %v295 = vld [vmem:[#allocation5 + $0x21c] sm:$0xf]
    %v296 = vld [vmem:[#allocation5 + $0x220] sm:$0xf]
    %v297 = vld [vmem:[#allocation5 + $0x224] sm:$0xf]
    %v298 = vld [vmem:[#allocation5 + $0x228] sm:$0xf]
    %v299 = vld [vmem:[#allocation5 + $0x22c] sm:$0xf]
    %v300 = vld [vmem:[#allocation5 + $0x230] sm:$0xf]
    %v301 = vld [vmem:[#allocation5 + $0x234] sm:$0xf]
    %v302 = vld [vmem:[#allocation5 + $0x238] sm:$0xf]
    %v303 = vld [vmem:[#allocation5 + $0x23c] sm:$0xf]
    %v304 = vld [vmem:[#allocation5 + $0x240] sm:$0xf]
    %v305 = vld [vmem:[#allocation5 + $0x244] sm:$0xf]
    %v306 = vld [vmem:[#allocation5 + $0x248] sm:$0xf]
    %v307 = vld [vmem:[#allocation5 + $0x24c] sm:$0xf]
    %v308 = vld [vmem:[#allocation5 + $0x250] sm:$0xf]
    %v309 = vld [vmem:[#allocation5 + $0x254] sm:$0xf]
    %v310 = vld [vmem:[#allocation5 + $0x258] sm:$0xf]
    %v311 = vld [vmem:[#allocation5 + $0x25c] sm:$0xf]
    %v312 = vld [vmem:[#allocation5 + $0x260] sm:$0xf]
    %v313 = vld [vmem:[#allocation5 + $0x264] sm:$0xf]
    %v314 = vld [vmem:[#allocation5 + $0x268] sm:$0xf]
    %v315 = vld [vmem:[#allocation5 + $0x26c] sm:$0xf]
    %v316 = vld [vmem:[#allocation5 + $0x270] sm:$0xf]
    %v317 = vld [vmem:[#allocation5 + $0x274] sm:$0xf]
    %v318 = vld [vmem:[#allocation5 + $0x278] sm:$0xf]
    %v319 = vld [vmem:[#allocation5 + $0x27c] sm:$0xf]
    %v320 = vld [vmem:[#allocation5 + $0x280] sm:$0xf]
    %v321 = vld [vmem:[#allocation5 + $0x284] sm:$0xf]
    %v322 = vld [vmem:[#allocation5 + $0x288] sm:$0xf]
    %v323 = vld [vmem:[#allocation5 + $0x28c] sm:$0xf]
    %v324 = vld [vmem:[#allocation5 + $0x290] sm:$0xf]
    %v325 = vld [vmem:[#allocation5 + $0x294] sm:$0xf]
    %v326 = vld [vmem:[#allocation5 + $0x298] sm:$0xf]
    %v327 = vld [vmem:[#allocation5 + $0x29c] sm:$0xf]
    %v328 = vld [vmem:[#allocation5 + $0x2a0] sm:$0xf]
    %v329 = vld [vmem:[#allocation5 + $0x2a4] sm:$0xf]
    %v330 = vld [vmem:[#allocation5 + $0x2a8] sm:$0xf]
    %v331 = vld [vmem:[#allocation5 + $0x2ac] sm:$0xf]
    %v332 = vld [vmem:[#allocation5 + $0x2b0] sm:$0xf]
    %v333 = vld [vmem:[#allocation5 + $0x2b4] sm:$0xf]
    %v334 = vld [vmem:[#allocation5 + $0x2b8] sm:$0xf]
    %v335 = vld [vmem:[#allocation5 + $0x2bc] sm:$0xf]
    %v336 = vld [vmem:[#allocation5 + $0x2c0] sm:$0xf]
    %v337 = vld [vmem:[#allocation5 + $0x2c4] sm:$0xf]
    %v338 = vld [vmem:[#allocation5 + $0x2c8] sm:$0xf]
    %v339 = vld [vmem:[#allocation5 + $0x2cc] sm:$0xf]
    %v340 = vld [vmem:[#allocation5 + $0x2d0] sm:$0xf]
    %v341 = vld [vmem:[#allocation5 + $0x2d4] sm:$0xf]
    %v342 = vld [vmem:[#allocation5 + $0x2d8] sm:$0xf]
    %v343 = vld [vmem:[#allocation5 + $0x2dc] sm:$0xf]
    %v344 = vld [vmem:[#allocation5 + $0x2e0] sm:$0xf]
    %v345 = vld [vmem:[#allocation5 + $0x2e4] sm:$0xf]
    %v346 = vld [vmem:[#allocation5 + $0x2e8] sm:$0xf]
    %v347 = vld [vmem:[#allocation5 + $0x2ec] sm:$0xf]
    %v348 = vld [vmem:[#allocation5 + $0x2f0] sm:$0xf]
    %v349 = vld [vmem:[#allocation5 + $0x2f4] sm:$0xf]
    %v350 = vld [vmem:[#allocation5 + $0x2f8] sm:$0xf]
    %v351 = vld [vmem:[#allocation5 + $0x2fc] sm:$0xf]
    %v352 = vld [vmem:[#allocation5 + $0x300] sm:$0x3]
    %v353 = vld [vmem:[%s2] sm:$0x1]
    %v355 = vlaneseq
    %v356 = vshrl.u32 %v355, 7
    %v357 = vsub.s32 0, %v356
    %v358 = vrot.slane %v353, %v357
    %v553 = vunpack.c.l.b16 %v160
    %v554 = vunpack.c.l.b16 %v161
    %v555 = vunpack.c.l.b16 %v162
    %v556 = vunpack.c.l.b16 %v163
    %v557 = vunpack.c.l.b16 %v164
    %v558 = vunpack.c.l.b16 %v165
    %v559 = vunpack.c.l.b16 %v166
    %v560 = vunpack.c.l.b16 %v167
    %v561 = vunpack.c.l.b16 %v168
    %v562 = vunpack.c.l.b16 %v169
    %v563 = vunpack.c.l.b16 %v170
    %v564 = vunpack.c.l.b16 %v171
    %v565 = vunpack.c.l.b16 %v172
    %v566 = vunpack.c.l.b16 %v173
    %v567 = vunpack.c.l.b16 %v174
    %v568 = vunpack.c.l.b16 %v175
    %v569 = vunpack.c.l.b16 %v176
    %v570 = vunpack.c.l.b16 %v177
    %v571 = vunpack.c.l.b16 %v178
    %v572 = vunpack.c.l.b16 %v179
    %v573 = vunpack.c.l.b16 %v180
    %v574 = vunpack.c.l.b16 %v181
    %v575 = vunpack.c.l.b16 %v182
    %v576 = vunpack.c.l.b16 %v183
    %v577 = vunpack.c.l.b16 %v184
    %v578 = vunpack.c.l.b16 %v185
    %v579 = vunpack.c.l.b16 %v186
    %v580 = vunpack.c.l.b16 %v187
    %v581 = vunpack.c.l.b16 %v188
    %v582 = vunpack.c.l.b16 %v189
    %v583 = vunpack.c.l.b16 %v190
    %v584 = vunpack.c.l.b16 %v191
    %v585 = vunpack.c.l.b16 %v192
    %v586 = vunpack.c.l.b16 %v193
    %v587 = vunpack.c.l.b16 %v194
    %v588 = vunpack.c.l.b16 %v195
    %v589 = vunpack.c.l.b16 %v196
    %v590 = vunpack.c.l.b16 %v197
    %v591 = vunpack.c.l.b16 %v198
    %v592 = vunpack.c.l.b16 %v199
    %v593 = vunpack.c.l.b16 %v200
    %v594 = vunpack.c.l.b16 %v201
    %v595 = vunpack.c.l.b16 %v202
    %v596 = vunpack.c.l.b16 %v203
    %v597 = vunpack.c.l.b16 %v204
    %v598 = vunpack.c.l.b16 %v205
    %v599 = vunpack.c.l.b16 %v206
    %v600 = vunpack.c.l.b16 %v207
    %v601 = vunpack.c.l.b16 %v208
    %v602 = vunpack.c.l.b16 %v209
    %v603 = vunpack.c.l.b16 %v210
    %v604 = vunpack.c.l.b16 %v211
    %v605 = vunpack.c.l.b16 %v212
    %v606 = vunpack.c.l.b16 %v213
    %v607 = vunpack.c.l.b16 %v214
    %v608 = vunpack.c.l.b16 %v215
    %v609 = vunpack.c.l.b16 %v216
    %v610 = vunpack.c.l.b16 %v217
    %v611 = vunpack.c.l.b16 %v218
    %v612 = vunpack.c.l.b16 %v219
    %v613 = vunpack.c.l.b16 %v220
    %v614 = vunpack.c.l.b16 %v221
    %v615 = vunpack.c.l.b16 %v222
    %v616 = vunpack.c.l.b16 %v223
    %v617 = vunpack.c.l.b16 %v224
    %v618 = vunpack.c.l.b16 %v225
    %v619 = vunpack.c.l.b16 %v226
    %v620 = vunpack.c.l.b16 %v227
    %v621 = vunpack.c.l.b16 %v228
    %v622 = vunpack.c.l.b16 %v229
    %v623 = vunpack.c.l.b16 %v230
    %v624 = vunpack.c.l.b16 %v231
    %v625 = vunpack.c.l.b16 %v232
    %v626 = vunpack.c.l.b16 %v233
    %v627 = vunpack.c.l.b16 %v234
    %v628 = vunpack.c.l.b16 %v235
    %v629 = vunpack.c.l.b16 %v236
    %v630 = vunpack.c.l.b16 %v237
    %v631 = vunpack.c.l.b16 %v238
    %v632 = vunpack.c.l.b16 %v239
    %v633 = vunpack.c.l.b16 %v240
    %v634 = vunpack.c.l.b16 %v241
    %v635 = vunpack.c.l.b16 %v242
    %v636 = vunpack.c.l.b16 %v243
    %v637 = vunpack.c.l.b16 %v244
    %v638 = vunpack.c.l.b16 %v245
    %v639 = vunpack.c.l.b16 %v246
    %v640 = vunpack.c.l.b16 %v247
    %v641 = vunpack.c.l.b16 %v248
    %v642 = vunpack.c.l.b16 %v249
    %v643 = vunpack.c.l.b16 %v250
    %v644 = vunpack.c.l.b16 %v251
    %v645 = vunpack.c.l.b16 %v252
    %v646 = vunpack.c.l.b16 %v253
    %v647 = vunpack.c.l.b16 %v254
    %v648 = vunpack.c.l.b16 %v255
    %v649 = vunpack.c.l.b16 %v256
    %v650 = vunpack.c.l.b16 %v257
    %v651 = vunpack.c.l.b16 %v258
    %v652 = vunpack.c.l.b16 %v259
    %v653 = vunpack.c.l.b16 %v260
    %v654 = vunpack.c.l.b16 %v261
    %v655 = vunpack.c.l.b16 %v262
    %v656 = vunpack.c.l.b16 %v263
    %v657 = vunpack.c.l.b16 %v264
    %v658 = vunpack.c.l.b16 %v265
    %v659 = vunpack.c.l.b16 %v266
    %v660 = vunpack.c.l.b16 %v267
    %v661 = vunpack.c.l.b16 %v268
    %v662 = vunpack.c.l.b16 %v269
    %v663 = vunpack.c.l.b16 %v270
    %v664 = vunpack.c.l.b16 %v271
    %v665 = vunpack.c.l.b16 %v272
    %v666 = vunpack.c.l.b16 %v273
    %v667 = vunpack.c.l.b16 %v274
    %v668 = vunpack.c.l.b16 %v275
    %v669 = vunpack.c.l.b16 %v276
    %v670 = vunpack.c.l.b16 %v277
    %v671 = vunpack.c.l.b16 %v278
    %v672 = vunpack.c.l.b16 %v279
    %v673 = vunpack.c.l.b16 %v280
    %v674 = vunpack.c.l.b16 %v281
    %v675 = vunpack.c.l.b16 %v282
    %v676 = vunpack.c.l.b16 %v283
    %v677 = vunpack.c.l.b16 %v284
    %v678 = vunpack.c.l.b16 %v285
    %v679 = vunpack.c.l.b16 %v286
    %v680 = vunpack.c.l.b16 %v287
    %v681 = vunpack.c.l.b16 %v288
    %v682 = vunpack.c.l.b16 %v289
    %v683 = vunpack.c.l.b16 %v290
    %v684 = vunpack.c.l.b16 %v291
    %v685 = vunpack.c.l.b16 %v292
    %v686 = vunpack.c.l.b16 %v293
    %v687 = vunpack.c.l.b16 %v294
    %v688 = vunpack.c.l.b16 %v295
    %v689 = vunpack.c.l.b16 %v296
    %v690 = vunpack.c.l.b16 %v297
    %v691 = vunpack.c.l.b16 %v298
    %v692 = vunpack.c.l.b16 %v299
    %v693 = vunpack.c.l.b16 %v300
    %v694 = vunpack.c.l.b16 %v301
    %v695 = vunpack.c.l.b16 %v302
    %v696 = vunpack.c.l.b16 %v303
    %v697 = vunpack.c.l.b16 %v304
    %v698 = vunpack.c.l.b16 %v305
    %v699 = vunpack.c.l.b16 %v306
    %v700 = vunpack.c.l.b16 %v307
    %v701 = vunpack.c.l.b16 %v308
    %v702 = vunpack.c.l.b16 %v309
    %v703 = vunpack.c.l.b16 %v310
    %v704 = vunpack.c.l.b16 %v311
    %v705 = vunpack.c.l.b16 %v312
    %v706 = vunpack.c.l.b16 %v313
    %v707 = vunpack.c.l.b16 %v314
    %v708 = vunpack.c.l.b16 %v315
    %v709 = vunpack.c.l.b16 %v316
    %v710 = vunpack.c.l.b16 %v317
    %v711 = vunpack.c.l.b16 %v318
    %v712 = vunpack.c.l.b16 %v319
    %v713 = vunpack.c.l.b16 %v320
    %v714 = vunpack.c.l.b16 %v321
    %v715 = vunpack.c.l.b16 %v322
    %v716 = vunpack.c.l.b16 %v323
    %v717 = vunpack.c.l.b16 %v324
    %v718 = vunpack.c.l.b16 %v325
    %v719 = vunpack.c.l.b16 %v326
    %v720 = vunpack.c.l.b16 %v327
    %v721 = vunpack.c.l.b16 %v328
    %v722 = vunpack.c.l.b16 %v329
    %v723 = vunpack.c.l.b16 %v330
    %v724 = vunpack.c.l.b16 %v331
    %v725 = vunpack.c.l.b16 %v332
    %v726 = vunpack.c.l.b16 %v333
    %v727 = vunpack.c.l.b16 %v334
    %v728 = vunpack.c.l.b16 %v335
    %v729 = vunpack.c.l.b16 %v336
    %v730 = vunpack.c.l.b16 %v337
    %v731 = vunpack.c.l.b16 %v338
    %v732 = vunpack.c.l.b16 %v339
    %v733 = vunpack.c.l.b16 %v340
    %v734 = vunpack.c.l.b16 %v341
    %v735 = vunpack.c.l.b16 %v342
    %v736 = vunpack.c.l.b16 %v343
    %v737 = vunpack.c.l.b16 %v344
    %v738 = vunpack.c.l.b16 %v345
    %v739 = vunpack.c.l.b16 %v346
    %v740 = vunpack.c.l.b16 %v347
    %v741 = vunpack.c.l.b16 %v348
    %v742 = vunpack.c.l.b16 %v349
    %v743 = vunpack.c.l.b16 %v350
    %v744 = vunpack.c.l.b16 %v351
    %v745 = vunpack.c.l.b16 %v352
    %v746 = vpack.c.b16 %v554, %v553
    %v747 = vpack.c.b16 %v556, %v555
    %v748 = vpack.c.b16 %v558, %v557
    %v749 = vpack.c.b16 %v560, %v559
    %v750 = vpack.c.b16 %v562, %v561
    %v751 = vpack.c.b16 %v564, %v563
    %v752 = vpack.c.b16 %v566, %v565
    %v753 = vpack.c.b16 %v568, %v567
    %v754 = vpack.c.b16 %v570, %v569
    %v755 = vpack.c.b16 %v572, %v571
    %v756 = vpack.c.b16 %v574, %v573
    %v757 = vpack.c.b16 %v576, %v575
    %v758 = vpack.c.b16 %v578, %v577
    %v759 = vpack.c.b16 %v580, %v579
    %v760 = vpack.c.b16 %v582, %v581
    %v761 = vpack.c.b16 %v584, %v583
    %v762 = vpack.c.b16 %v586, %v585
    %v763 = vpack.c.b16 %v588, %v587
    %v764 = vpack.c.b16 %v590, %v589
    %v765 = vpack.c.b16 %v592, %v591
    %v766 = vpack.c.b16 %v594, %v593
    %v767 = vpack.c.b16 %v596, %v595
    %v768 = vpack.c.b16 %v598, %v597
    %v769 = vpack.c.b16 %v600, %v599
    %v770 = vpack.c.b16 %v602, %v601
    %v771 = vpack.c.b16 %v604, %v603
    %v772 = vpack.c.b16 %v606, %v605
    %v773 = vpack.c.b16 %v608, %v607
    %v774 = vpack.c.b16 %v610, %v609
    %v775 = vpack.c.b16 %v612, %v611
    %v776 = vpack.c.b16 %v614, %v613
    %v777 = vpack.c.b16 %v616, %v615
    %v778 = vpack.c.b16 %v618, %v617
    %v779 = vpack.c.b16 %v620, %v619
    %v780 = vpack.c.b16 %v622, %v621
    %v781 = vpack.c.b16 %v624, %v623
    %v782 = vpack.c.b16 %v626, %v625
    %v783 = vpack.c.b16 %v628, %v627
    %v784 = vpack.c.b16 %v630, %v629
    %v785 = vpack.c.b16 %v632, %v631
    %v786 = vpack.c.b16 %v634, %v633
    %v787 = vpack.c.b16 %v636, %v635
    %v788 = vpack.c.b16 %v638, %v637
    %v789 = vpack.c.b16 %v640, %v639
    %v790 = vpack.c.b16 %v642, %v641
    %v791 = vpack.c.b16 %v644, %v643
    %v792 = vpack.c.b16 %v646, %v645
    %v793 = vpack.c.b16 %v648, %v647
    %v794 = vpack.c.b16 %v650, %v649
    %v795 = vpack.c.b16 %v652, %v651
    %v796 = vpack.c.b16 %v654, %v653
    %v797 = vpack.c.b16 %v656, %v655
    %v798 = vpack.c.b16 %v658, %v657
    %v799 = vpack.c.b16 %v660, %v659
    %v800 = vpack.c.b16 %v662, %v661
    %v801 = vpack.c.b16 %v664, %v663
    %v802 = vpack.c.b16 %v666, %v665
    %v803 = vpack.c.b16 %v668, %v667
    %v804 = vpack.c.b16 %v670, %v669
    %v805 = vpack.c.b16 %v672, %v671
    %v806 = vpack.c.b16 %v674, %v673
    %v807 = vpack.c.b16 %v676, %v675
    %v808 = vpack.c.b16 %v678, %v677
    %v809 = vpack.c.b16 %v680, %v679
    %v810 = vpack.c.b16 %v682, %v681
    %v811 = vpack.c.b16 %v684, %v683
    %v812 = vpack.c.b16 %v686, %v685
    %v813 = vpack.c.b16 %v688, %v687
    %v814 = vpack.c.b16 %v690, %v689
    %v815 = vpack.c.b16 %v692, %v691
    %v816 = vpack.c.b16 %v694, %v693
    %v817 = vpack.c.b16 %v696, %v695
    %v818 = vpack.c.b16 %v698, %v697
    %v819 = vpack.c.b16 %v700, %v699
    %v820 = vpack.c.b16 %v702, %v701
    %v821 = vpack.c.b16 %v704, %v703
    %v822 = vpack.c.b16 %v706, %v705
    %v823 = vpack.c.b16 %v708, %v707
    %v824 = vpack.c.b16 %v710, %v709
    %v825 = vpack.c.b16 %v712, %v711
    %v826 = vpack.c.b16 %v714, %v713
    %v827 = vpack.c.b16 %v716, %v715
    %v828 = vpack.c.b16 %v718, %v717
    %v829 = vpack.c.b16 %v720, %v719
    %v830 = vpack.c.b16 %v722, %v721
    %v831 = vpack.c.b16 %v724, %v723
    %v832 = vpack.c.b16 %v726, %v725
    %v833 = vpack.c.b16 %v728, %v727
    %v834 = vpack.c.b16 %v730, %v729
    %v835 = vpack.c.b16 %v732, %v731
    %v836 = vpack.c.b16 %v734, %v733
    %v837 = vpack.c.b16 %v736, %v735
    %v838 = vpack.c.b16 %v738, %v737
    %v839 = vpack.c.b16 %v740, %v739
    %v840 = vpack.c.b16 %v742, %v741
    %v841 = vpack.c.b16 %v744, %v743
    %v842 = vpack.c.b16 %v745, %v745
    %vm939 = vcmask 31744
    %v941 = vsel %vm939, %v159, 0
    %vm943 = vcmask 1041408
    %v945 = vsel %vm943, %v842, 0
    %947 = vmatprep.subr.bf16.mxu0 0
    %948 = vmatpush1.bf16.msra.mxu0 %v746
    %949 = vmatprep.subr.bf16.mxu0 0
    %950 = vmatpush1.bf16.msra.mxu0 %v747
    %951 = vmatprep.subr.bf16.mxu0 0
    %952 = vmatpush1.bf16.msra.mxu0 %v748
    %953 = vmatprep.subr.bf16.mxu0 0
    %954 = vmatpush1.bf16.msra.mxu0 %v749
    %955 = vmatprep.subr.bf16.mxu0 0
    %956 = vmatpush1.bf16.msra.mxu0 %v750
    %957 = vmatprep.subr.bf16.mxu0 0
    %958 = vmatpush1.bf16.msra.mxu0 %v751
    %959 = vmatprep.subr.bf16.mxu0 0
    %960 = vmatpush1.bf16.msra.mxu0 %v752
    %961 = vmatprep.subr.bf16.mxu0 0
    %962 = vmatpush1.bf16.msra.mxu0 %v753
    %963 = vmatprep.subr.bf16.mxu0 0
    %964 = vmatpush1.bf16.msra.mxu0 %v754
    %965 = vmatprep.subr.bf16.mxu0 0
    %966 = vmatpush1.bf16.msra.mxu0 %v755
    %967 = vmatprep.subr.bf16.mxu0 0
    %968 = vmatpush1.bf16.msra.mxu0 %v756
    %969 = vmatprep.subr.bf16.mxu0 0
    %970 = vmatpush1.bf16.msra.mxu0 %v757
    %971 = vmatprep.subr.bf16.mxu0 0
    %972 = vmatpush1.bf16.msra.mxu0 %v758
    %973 = vmatprep.subr.bf16.mxu0 0
    %974 = vmatpush1.bf16.msra.mxu0 %v759
    %975 = vmatprep.subr.bf16.mxu0 0
    %976 = vmatpush1.bf16.msra.mxu0 %v760
    %977 = vmatprep.subr.bf16.mxu0 0
    %978 = vmatpush1.bf16.msra.mxu0 %v761
    %979 = vmatprep.mubr.bf16.mxu0 %v148
    %980 = vmatmul.mubr.bf16.gmra.mrb[0].mxu0 %v147
    %v981 = vpop.f32.mrb[0].mxu0
    %v982 = vadd.f32 %v358, %v981
    %v983 = vpop.f32.mrb[0].mxu0
    %v984 = vpop.f32.mrb[0].mxu0
    %v985 = vpop.f32.mrb[0].mxu0
    %986 = vdwg.mxu0
    %987 = vmatprep.subr.bf16.mxu0 0
    %988 = vmatpush1.bf16.msra.mxu0 %v762
    %989 = vmatprep.subr.bf16.mxu0 0
    %990 = vmatpush1.bf16.msra.mxu0 %v763
    %991 = vmatprep.subr.bf16.mxu0 0
    %992 = vmatpush1.bf16.msra.mxu0 %v764
    %993 = vmatprep.subr.bf16.mxu0 0
    %994 = vmatpush1.bf16.msra.mxu0 %v765
    %995 = vmatprep.subr.bf16.mxu0 0
    %996 = vmatpush1.bf16.msra.mxu0 %v766
    %997 = vmatprep.subr.bf16.mxu0 0
    %998 = vmatpush1.bf16.msra.mxu0 %v767
    %999 = vmatprep.subr.bf16.mxu0 0
    %1000 = vmatpush1.bf16.msra.mxu0 %v768
    %1001 = vmatprep.subr.bf16.mxu0 0
    %1002 = vmatpush1.bf16.msra.mxu0 %v769
    %1003 = vmatprep.subr.bf16.mxu0 0
    %1004 = vmatpush1.bf16.msra.mxu0 %v770
    %1005 = vmatprep.subr.bf16.mxu0 0
    %1006 = vmatpush1.bf16.msra.mxu0 %v771
    %1007 = vmatprep.subr.bf16.mxu0 0
    %1008 = vmatpush1.bf16.msra.mxu0 %v772
    %1009 = vmatprep.subr.bf16.mxu0 0
    %1010 = vmatpush1.bf16.msra.mxu0 %v773
    %1011 = vmatprep.subr.bf16.mxu0 0
    %1012 = vmatpush1.bf16.msra.mxu0 %v774
    %1013 = vmatprep.subr.bf16.mxu0 0
    %1014 = vmatpush1.bf16.msra.mxu0 %v775
    %1015 = vmatprep.subr.bf16.mxu0 0
    %1016 = vmatpush1.bf16.msra.mxu0 %v776
    %1017 = vmatprep.subr.bf16.mxu0 0
    %1018 = vmatpush1.bf16.msra.mxu0 %v777
    %1019 = vmatprep.mubr.bf16.mxu0 %v150
    %1020 = vmatmul.mubr.bf16.gmra.mrb[0].mxu0 %v149
    %v1021 = vpop.f32.mrb[0].mxu0
    %v1022 = vadd.f32 %v982, %v1021
    %v1023 = vpop.f32.mrb[0].mxu0
    %v1024 = vpop.f32.mrb[0].mxu0
    %v1025 = vpop.f32.mrb[0].mxu0
    %1026 = vdwg.mxu0
    %1027 = vmatprep.subr.bf16.mxu0 0
    %1028 = vmatpush1.bf16.msra.mxu0 %v778
    %1029 = vmatprep.subr.bf16.mxu0 0
    %1030 = vmatpush1.bf16.msra.mxu0 %v779
    %1031 = vmatprep.subr.bf16.mxu0 0
    %1032 = vmatpush1.bf16.msra.mxu0 %v780
    %1033 = vmatprep.subr.bf16.mxu0 0
    %1034 = vmatpush1.bf16.msra.mxu0 %v781
    %1035 = vmatprep.subr.bf16.mxu0 0
    %1036 = vmatpush1.bf16.msra.mxu0 %v782
    %1037 = vmatprep.subr.bf16.mxu0 0
    %1038 = vmatpush1.bf16.msra.mxu0 %v783
    %1039 = vmatprep.subr.bf16.mxu0 0
    %1040 = vmatpush1.bf16.msra.mxu0 %v784
    %1041 = vmatprep.subr.bf16.mxu0 0
    %1042 = vmatpush1.bf16.msra.mxu0 %v785
    %1043 = vmatprep.subr.bf16.mxu0 0
    %1044 = vmatpush1.bf16.msra.mxu0 %v786
    %1045 = vmatprep.subr.bf16.mxu0 0
    %1046 = vmatpush1.bf16.msra.mxu0 %v787
    %1047 = vmatprep.subr.bf16.mxu0 0
    %1048 = vmatpush1.bf16.msra.mxu0 %v788
    %1049 = vmatprep.subr.bf16.mxu0 0
    %1050 = vmatpush1.bf16.msra.mxu0 %v789
    %1051 = vmatprep.subr.bf16.mxu0 0
    %1052 = vmatpush1.bf16.msra.mxu0 %v790
    %1053 = vmatprep.subr.bf16.mxu0 0
    %1054 = vmatpush1.bf16.msra.mxu0 %v791
    %1055 = vmatprep.subr.bf16.mxu0 0
    %1056 = vmatpush1.bf16.msra.mxu0 %v792
    %1057 = vmatprep.subr.bf16.mxu0 0
    %1058 = vmatpush1.bf16.msra.mxu0 %v793
    %1059 = vmatprep.mubr.bf16.mxu0 %v152
    %1060 = vmatmul.mubr.bf16.gmra.mrb[0].mxu0 %v151
    %v1061 = vpop.f32.mrb[0].mxu0
    %v1062 = vadd.f32 %v1022, %v1061
    %v1063 = vpop.f32.mrb[0].mxu0
    %v1064 = vpop.f32.mrb[0].mxu0
    %v1065 = vpop.f32.mrb[0].mxu0
    %1066 = vdwg.mxu0
    %1067 = vmatprep.subr.bf16.mxu0 0
    %1068 = vmatpush1.bf16.msra.mxu0 %v794
    %1069 = vmatprep.subr.bf16.mxu0 0
    %1070 = vmatpush1.bf16.msra.mxu0 %v795
    %1071 = vmatprep.subr.bf16.mxu0 0
    %1072 = vmatpush1.bf16.msra.mxu0 %v796
    %1073 = vmatprep.subr.bf16.mxu0 0
    %1074 = vmatpush1.bf16.msra.mxu0 %v797
    %1075 = vmatprep.subr.bf16.mxu0 0
    %1076 = vmatpush1.bf16.msra.mxu0 %v798
    %1077 = vmatprep.subr.bf16.mxu0 0
    %1078 = vmatpush1.bf16.msra.mxu0 %v799
    %1079 = vmatprep.subr.bf16.mxu0 0
    %1080 = vmatpush1.bf16.msra.mxu0 %v800
    %1081 = vmatprep.subr.bf16.mxu0 0
    %1082 = vmatpush1.bf16.msra.mxu0 %v801
    %1083 = vmatprep.subr.bf16.mxu0 0
    %1084 = vmatpush1.bf16.msra.mxu0 %v802
    %1085 = vmatprep.subr.bf16.mxu0 0
    %1086 = vmatpush1.bf16.msra.mxu0 %v803
    %1087 = vmatprep.subr.bf16.mxu0 0
    %1088 = vmatpush1.bf16.msra.mxu0 %v804
    %1089 = vmatprep.subr.bf16.mxu0 0
    %1090 = vmatpush1.bf16.msra.mxu0 %v805
    %1091 = vmatprep.subr.bf16.mxu0 0
    %1092 = vmatpush1.bf16.msra.mxu0 %v806
    %1093 = vmatprep.subr.bf16.mxu0 0
    %1094 = vmatpush1.bf16.msra.mxu0 %v807
    %1095 = vmatprep.subr.bf16.mxu0 0
    %1096 = vmatpush1.bf16.msra.mxu0 %v808
    %1097 = vmatprep.subr.bf16.mxu0 0
    %1098 = vmatpush1.bf16.msra.mxu0 %v809
    %1099 = vmatprep.mubr.bf16.mxu0 %v154
    %1100 = vmatmul.mubr.bf16.gmra.mrb[0].mxu0 %v153
    %v1101 = vpop.f32.mrb[0].mxu0
    %v1102 = vadd.f32 %v1062, %v1101
    %v1103 = vpop.f32.mrb[0].mxu0
    %v1104 = vpop.f32.mrb[0].mxu0
    %v1105 = vpop.f32.mrb[0].mxu0
    %1106 = vdwg.mxu0
    %1107 = vmatprep.subr.bf16.mxu0 0
    %1108 = vmatpush1.bf16.msra.mxu0 %v810
    %1109 = vmatprep.subr.bf16.mxu0 0
    %1110 = vmatpush1.bf16.msra.mxu0 %v811
    %1111 = vmatprep.subr.bf16.mxu0 0
    %1112 = vmatpush1.bf16.msra.mxu0 %v812
    %1113 = vmatprep.subr.bf16.mxu0 0
    %1114 = vmatpush1.bf16.msra.mxu0 %v813
    %1115 = vmatprep.subr.bf16.mxu0 0
    %1116 = vmatpush1.bf16.msra.mxu0 %v814
    %1117 = vmatprep.subr.bf16.mxu0 0
    %1118 = vmatpush1.bf16.msra.mxu0 %v815
    %1119 = vmatprep.subr.bf16.mxu0 0
    %1120 = vmatpush1.bf16.msra.mxu0 %v816
    %1121 = vmatprep.subr.bf16.mxu0 0
    %1122 = vmatpush1.bf16.msra.mxu0 %v817
    %1123 = vmatprep.subr.bf16.mxu0 0
    %1124 = vmatpush1.bf16.msra.mxu0 %v818
    %1125 = vmatprep.subr.bf16.mxu0 0
    %1126 = vmatpush1.bf16.msra.mxu0 %v819
    %1127 = vmatprep.subr.bf16.mxu0 0
    %1128 = vmatpush1.bf16.msra.mxu0 %v820
    %1129 = vmatprep.subr.bf16.mxu0 0
    %1130 = vmatpush1.bf16.msra.mxu0 %v821
    %1131 = vmatprep.subr.bf16.mxu0 0
    %1132 = vmatpush1.bf16.msra.mxu0 %v822
    %1133 = vmatprep.subr.bf16.mxu0 0
    %1134 = vmatpush1.bf16.msra.mxu0 %v823
    %1135 = vmatprep.subr.bf16.mxu0 0
    %1136 = vmatpush1.bf16.msra.mxu0 %v824
    %1137 = vmatprep.subr.bf16.mxu0 0
    %1138 = vmatpush1.bf16.msra.mxu0 %v825
    %1139 = vmatprep.mubr.bf16.mxu0 %v156
    %1140 = vmatmul.mubr.bf16.gmra.mrb[0].mxu0 %v155
    %v1141 = vpop.f32.mrb[0].mxu0
    %v1142 = vadd.f32 %v1102, %v1141
    %v1143 = vpop.f32.mrb[0].mxu0
    %v1144 = vpop.f32.mrb[0].mxu0
    %v1145 = vpop.f32.mrb[0].mxu0
    %1146 = vdwg.mxu0
    %1147 = vmatprep.subr.bf16.mxu0 0
    %1148 = vmatpush1.bf16.msra.mxu0 %v826
    %1149 = vmatprep.subr.bf16.mxu0 0
    %1150 = vmatpush1.bf16.msra.mxu0 %v827
    %1151 = vmatprep.subr.bf16.mxu0 0
    %1152 = vmatpush1.bf16.msra.mxu0 %v828
    %1153 = vmatprep.subr.bf16.mxu0 0
    %1154 = vmatpush1.bf16.msra.mxu0 %v829
    %1155 = vmatprep.subr.bf16.mxu0 0
    %1156 = vmatpush1.bf16.msra.mxu0 %v830
    %1157 = vmatprep.subr.bf16.mxu0 0
    %1158 = vmatpush1.bf16.msra.mxu0 %v831
    %1159 = vmatprep.subr.bf16.mxu0 0
    %1160 = vmatpush1.bf16.msra.mxu0 %v832
    %1161 = vmatprep.subr.bf16.mxu0 0
    %1162 = vmatpush1.bf16.msra.mxu0 %v833
    %1163 = vmatprep.subr.bf16.mxu0 0
    %1164 = vmatpush1.bf16.msra.mxu0 %v834
    %1165 = vmatprep.subr.bf16.mxu0 0
    %1166 = vmatpush1.bf16.msra.mxu0 %v835
    %1167 = vmatprep.subr.bf16.mxu0 0
    %1168 = vmatpush1.bf16.msra.mxu0 %v836
    %1169 = vmatprep.subr.bf16.mxu0 0
    %1170 = vmatpush1.bf16.msra.mxu0 %v837
    %1171 = vmatprep.subr.bf16.mxu0 0
    %1172 = vmatpush1.bf16.msra.mxu0 %v838
    %1173 = vmatprep.subr.bf16.mxu0 0
    %1174 = vmatpush1.bf16.msra.mxu0 %v839
    %1175 = vmatprep.subr.bf16.mxu0 0
    %1176 = vmatpush1.bf16.msra.mxu0 %v840
    %1177 = vmatprep.subr.bf16.mxu0 0
    %1178 = vmatpush1.bf16.msra.mxu0 %v841
    %1179 = vmatprep.mubr.bf16.mxu0 %v158
    %1180 = vmatmul.mubr.bf16.gmra.mrb[0].mxu0 %v157
    %v1181 = vpop.f32.mrb[0].mxu0
    %v1182 = vadd.f32 %v1142, %v1181
    %v1183 = vpop.f32.mrb[0].mxu0
    %v1184 = vpop.f32.mrb[0].mxu0
    %v1185 = vpop.f32.mrb[0].mxu0
    %1186 = vdwg.mxu0
    %1187 = vmatprep.subr.bf16.mxu0 0
    %1188 = vmatpush1.bf16.msra.mxu0 %v945
    %1189 = vmatprep.subr.bf16.mxu0 0
    %1190 = vmatpush1.bf16.msra.mxu0 0
    %1191 = vmatprep.subr.bf16.mxu0 0
    %1192 = vmatpush1.bf16.msra.mxu0 0
    %1193 = vmatprep.subr.bf16.mxu0 0
    %1194 = vmatpush1.bf16.msra.mxu0 0
    %1195 = vmatprep.subr.bf16.mxu0 0
    %1196 = vmatpush1.bf16.msra.mxu0 0
    %1197 = vmatprep.subr.bf16.mxu0 0
    %1198 = vmatpush1.bf16.msra.mxu0 0
    %1199 = vmatprep.subr.bf16.mxu0 0
    %1200 = vmatpush1.bf16.msra.mxu0 0
    %1201 = vmatprep.subr.bf16.mxu0 0
    %1202 = vmatpush1.bf16.msra.mxu0 0
    %1203 = vmatprep.subr.bf16.mxu0 0
    %1204 = vmatpush1.bf16.msra.mxu0 0
    %1205 = vmatprep.subr.bf16.mxu0 0
    %1206 = vmatpush1.bf16.msra.mxu0 0
    %1207 = vmatprep.subr.bf16.mxu0 0
    %1208 = vmatpush1.bf16.msra.mxu0 0
    %1209 = vmatprep.subr.bf16.mxu0 0
    %1210 = vmatpush1.bf16.msra.mxu0 0
    %1211 = vmatprep.subr.bf16.mxu0 0
    %1212 = vmatpush1.bf16.msra.mxu0 0
    %1213 = vmatprep.subr.bf16.mxu0 0
    %1214 = vmatpush1.bf16.msra.mxu0 0
    %1215 = vmatprep.subr.bf16.mxu0 0
    %1216 = vmatpush1.bf16.msra.mxu0 0
    %1217 = vmatprep.subr.bf16.mxu0 0
    %1218 = vmatpush1.bf16.msra.mxu0 0
    %1219 = vmatprep.mubr.bf16.mxu0 0
    %1220 = vmatmul.mubr.bf16.gmra.mrb[0].mxu0 %v941
    %v1221 = vpop.f32.mrb[0].mxu0
    %v1222 = vadd.f32 %v1182, %v1221
    %v1223 = vpop.f32.mrb[0].mxu0
    %v1224 = vpop.f32.mrb[0].mxu0
    %v1225 = vpop.f32.mrb[0].mxu0
    %1226 = vdwg.mxu0
    %v1227 = vmax.f32 %v1222, 0.0
    %v1228 = vpack.c.bf16 %v1227, %v1227
    %v1229 = vld [vmem:[#allocation7] sm:$0xf]
    %v1230 = vld [vmem:[#allocation7 + $0x4] sm:$0xf]
    %v1231 = vld [vmem:[#allocation7 + $0x8] sm:$0xf]
    %v1232 = vld [vmem:[#allocation7 + $0xc] sm:$0xf]
    %v1233 = vld [vmem:[#allocation7 + $0x10] sm:$0xf]
    %v1234 = vld [vmem:[#allocation7 + $0x14] sm:$0xf]
    %v1235 = vld [vmem:[#allocation7 + $0x18] sm:$0xf]
    %v1236 = vld [vmem:[#allocation7 + $0x1c] sm:$0xf]
    %v1237 = vld [vmem:[#allocation7 + $0x20] sm:$0xf]
    %v1238 = vld [vmem:[#allocation7 + $0x24] sm:$0xf]
    %v1239 = vld [vmem:[#allocation7 + $0x28] sm:$0xf]
    %v1240 = vld [vmem:[#allocation7 + $0x2c] sm:$0xf]
    %v1241 = vld [vmem:[#allocation7 + $0x30] sm:$0xf]
    %v1242 = vld [vmem:[#allocation7 + $0x34] sm:$0xf]
    %v1243 = vld [vmem:[#allocation7 + $0x38] sm:$0xf]
    %v1244 = vld [vmem:[#allocation7 + $0x3c] sm:$0xf]
    %v1245 = vld [vmem:[%s4] sm:$0x1]
    %v1247 = vlaneseq
    %v1248 = vshrl.u32 %v1247, 7
    %v1249 = vsub.s32 0, %v1248
    %v1250 = vrot.slane %v1245, %v1249
    %v1268 = vunpack.c.l.b16 %v1229
    %v1269 = vunpack.c.l.b16 %v1230
    %v1270 = vunpack.c.l.b16 %v1231
    %v1271 = vunpack.c.l.b16 %v1232
    %v1272 = vunpack.c.l.b16 %v1233
    %v1273 = vunpack.c.l.b16 %v1234
    %v1274 = vunpack.c.l.b16 %v1235
    %v1275 = vunpack.c.l.b16 %v1236
    %v1276 = vunpack.c.l.b16 %v1237
    %v1277 = vunpack.c.l.b16 %v1238
    %v1278 = vunpack.c.l.b16 %v1239
    %v1279 = vunpack.c.l.b16 %v1240
    %v1280 = vunpack.c.l.b16 %v1241
    %v1281 = vunpack.c.l.b16 %v1242
    %v1282 = vunpack.c.l.b16 %v1243
    %v1283 = vunpack.c.l.b16 %v1244
    %v1284 = vpack.c.b16 %v1269, %v1268
    %v1285 = vpack.c.b16 %v1271, %v1270
    %v1286 = vpack.c.b16 %v1273, %v1272
    %v1287 = vpack.c.b16 %v1275, %v1274
    %v1288 = vpack.c.b16 %v1277, %v1276
    %v1289 = vpack.c.b16 %v1279, %v1278
    %v1290 = vpack.c.b16 %v1281, %v1280
    %v1291 = vpack.c.b16 %v1283, %v1282
    %1300 = vmatprep.subr.bf16.mxu0 0
    %1301 = vmatpush1.bf16.msra.mxu0 %v1284
    %1302 = vmatprep.subr.bf16.mxu0 0
    %1303 = vmatpush1.bf16.msra.mxu0 %v1285
    %1304 = vmatprep.subr.bf16.mxu0 0
    %1305 = vmatpush1.bf16.msra.mxu0 %v1286
    %1306 = vmatprep.subr.bf16.mxu0 0
    %1307 = vmatpush1.bf16.msra.mxu0 %v1287
    %1308 = vmatprep.subr.bf16.mxu0 0
    %1309 = vmatpush1.bf16.msra.mxu0 %v1288
    %1310 = vmatprep.subr.bf16.mxu0 0
    %1311 = vmatpush1.bf16.msra.mxu0 %v1289
    %1312 = vmatprep.subr.bf16.mxu0 0
    %1313 = vmatpush1.bf16.msra.mxu0 %v1290
    %1314 = vmatprep.subr.bf16.mxu0 0
    %1315 = vmatpush1.bf16.msra.mxu0 %v1291
    %1316 = vmatprep.subr.bf16.mxu0 0
    %1317 = vmatpush1.bf16.msra.mxu0 0
    %1318 = vmatprep.subr.bf16.mxu0 0
    %1319 = vmatpush1.bf16.msra.mxu0 0
    %1320 = vmatprep.subr.bf16.mxu0 0
    %1321 = vmatpush1.bf16.msra.mxu0 0
    %1322 = vmatprep.subr.bf16.mxu0 0
    %1323 = vmatpush1.bf16.msra.mxu0 0
    %1324 = vmatprep.subr.bf16.mxu0 0
    %1325 = vmatpush1.bf16.msra.mxu0 0
    %1326 = vmatprep.subr.bf16.mxu0 0
    %1327 = vmatpush1.bf16.msra.mxu0 0
    %1328 = vmatprep.subr.bf16.mxu0 0
    %1329 = vmatpush1.bf16.msra.mxu0 0
    %1330 = vmatprep.subr.bf16.mxu0 0
    %1331 = vmatpush1.bf16.msra.mxu0 0
    %1332 = vmatprep.mubr.bf16.mxu0 0
    %1333 = vmatmul.mubr.bf16.gmra.mrb[0].mxu0 %v1228
    %v1334 = vpop.f32.mrb[0].mxu0
    %v1335 = vadd.f32 %v1250, %v1334
    %v1336 = vpop.f32.mrb[0].mxu0
    %v1337 = vpop.f32.mrb[0].mxu0
    %v1338 = vpop.f32.mrb[0].mxu0
    %1339 = vdwg.mxu0
    %v1340 = vmax.f32 %v1335, 0.0
    %v1341 = vld [vmem:[%s5] sm:$0x1]
    %v1343 = vlaneseq
    %v1344 = vshrl.u32 %v1343, 7
    %v1345 = vsub.s32 0, %v1344
    %v1346 = vrot.slane %v1341, %v1345
    %v1348 = vmul.f32 %v1340, %v1346
    %v1349 = vsel %vm943, %v1348, 0.0
    %1350 = vadd.xlane.f32.xlu0 %v1349
    %v1351 = vpop.xlane.xlu0 %1350
    %v1352 = vld [vmem:[#allocation2] sm:$0x1]
    %v1354 = vlaneseq
    %v1355 = vshrl.u32 %v1354, 7
    %v1356 = vsub.s32 0, %v1355
    %v1357 = vrot.slane %v1352, %v1356
    %v1359 = vadd.f32 %v1351, %v1357
    %vm1360 = vcmask 1024
    %1361 = vst.msk [vmem:[%s7] sm:$0x3] %vm1360, %v1359
    // Predicated region
    $region42: #{tpu_custom_call.1} parent=1 // pred_check
      _
    $region43: #{tpu_custom_call.1} parent=1 // pred_check_branch
      %1363 = sbr.rel (0) target = $region45
    $region44: #{tpu_custom_call.1} parent=1 // pred_region
      _
    $region45: #{tpu_custom_call.1} parent=1 // pred_fallthru
      _
    // Predicated region
    $region46: #{tpu_custom_call.1} parent=1 // pred_check
      _
    $region47: #{tpu_custom_call.1} parent=1 // pred_check_branch
      %1365 = sbr.rel (0) target = $region49
    $region48: #{tpu_custom_call.1} parent=1 // pred_region
      _
    $region49: #{tpu_custom_call.1} parent=1 // pred_fallthru
      _
    %1366 = vsyncpa [#allocation4], 1
    %1367 = vsyncpa [#allocation6], 1

</llo_original>
